<compile_context>
chip_gen: v5e
topology: v5e:2x2
jax: 0.10.0
libtpu: 0.0.40
codegen_flags: <defaults>
</compile_context>

<pallas_src>
import functools

import jax
import jax.numpy as jnp
from jax.experimental import pallas as pl
from jax.experimental.pallas import tpu as pltpu

LANE = 128
SUBLANE = 8
MAX_TILE_M = 512          # row tile for the output / A sublane dim
MAX_TILE_K = 2048         # reduction tile over the A lane dim
RESIDENT_XW_BYTES = 4 << 20   # keep XW VMEM-resident if bf16 size <= 4 MiB
                              # (double-buffered -> 8 MiB, safe on v7x 64 MiB)


def _round_up(x, m):
    return (x + m - 1) // m * m


def _choose_tiles(n):
    """Pick (n_pad, tile_m, tile_k) with tile_m | n_pad and tile_k | n_pad."""
    n_pad = _round_up(n, LANE)
    if n_pad <= MAX_TILE_M:
        tile_m = n_pad
    else:
        tile_m = MAX_TILE_M
        n_pad = _round_up(n_pad, MAX_TILE_M)
    if n_pad <= MAX_TILE_K:
        tile_k = n_pad
    else:
        tile_k = MAX_TILE_K
        n_pad = _round_up(n_pad, MAX_TILE_K)   # MAX_TILE_M divides MAX_TILE_K
    # v7x megacore: make sure the "parallel" row axis has at least 2 blocks.
    if n_pad // tile_m < 2:
        half = n_pad // 2
        if half >= SUBLANE and half % SUBLANE == 0:
            tile_m = half
    return n_pad, tile_m, tile_k


# ----------------------------- Pallas kernels -------------------------------

def _xw_kernel(x_ref, w_ref, o_ref):
    # Feature transform X @ W (bf16 operands, f32 MXU accumulate, bf16 out).
    o_ref[...] = jnp.dot(
        x_ref[...], w_ref[...], preferred_element_type=jnp.float32
    ).astype(o_ref.dtype)


def _prop_kernel(a_ref, xw_ref, b_ref, o_ref, acc_ref, *,
                 apply_relu, resident, tile_k):
    # A_hat @ XW over grid (row tiles, k tiles) with an f32 accumulator.
    k = pl.program_id(1)

    @pl.when(k == 0)
    def _init():
        acc_ref[...] = jnp.zeros_like(acc_ref)

    if resident:
        # XW is fully VMEM-resident; slice the current reduction block.
        k0 = pl.multiple_of(k * tile_k, tile_k)
        xw = xw_ref[pl.ds(k0, tile_k), :]
    else:
        xw = xw_ref[...]

    acc_ref[...] += jnp.dot(a_ref[...], xw, preferred_element_type=jnp.float32)

    @pl.when(k == pl.num_programs(1) - 1)
    def _finalize():
        h = acc_ref[...] + b_ref[...]
        if apply_relu:
            h = jnp.maximum(h, 0.0)
        o_ref[...] = h.astype(o_ref.dtype)


def _feature_transform(x_pad, w_pad, tile_m):
    n_pad, cin_pad = x_pad.shape
    cout_pad = w_pad.shape[1]
    flops = 2 * n_pad * cin_pad * cout_pad
    bytes_accessed = 2 * (n_pad * cin_pad + cin_pad * cout_pad + n_pad * cout_pad)
    return pl.pallas_call(
        _xw_kernel,
        out_shape=jax.ShapeDtypeStruct((n_pad, cout_pad), jnp.bfloat16),
        grid_spec=pltpu.PrefetchScalarGridSpec(
            num_scalar_prefetch=0,
            grid=(n_pad // tile_m,),
            in_specs=[
                pl.BlockSpec((tile_m, cin_pad), lambda i: (i, 0)),
                pl.BlockSpec((cin_pad, cout_pad), lambda i: (0, 0)),
            ],
            out_specs=pl.BlockSpec((tile_m, cout_pad), lambda i: (i, 0)),
        ),
        compiler_params=pltpu.CompilerParams(
            dimension_semantics=("parallel",)),
        cost_estimate=pl.CostEstimate(
            flops=flops, transcendentals=0, bytes_accessed=bytes_accessed),
    )(x_pad, w_pad)


def _propagate(a_bf16, xw_bf16, b_pad, tile_m, tile_k, apply_relu, out_dtype):
    n_pad = a_bf16.shape[0]
    cout_pad = xw_bf16.shape[1]
    xw_bytes = n_pad * cout_pad * 2
    resident = xw_bytes <= RESIDENT_XW_BYTES

    if resident:
        xw_spec = pl.BlockSpec((n_pad, cout_pad), lambda i, k: (0, 0))
    else:
        xw_spec = pl.BlockSpec((tile_k, cout_pad), lambda i, k: (k, 0))

    kernel = functools.partial(_prop_kernel, apply_relu=apply_relu,
                               resident=resident, tile_k=tile_k)
    out_itemsize = jnp.dtype(out_dtype).itemsize
    flops = 2 * n_pad * n_pad * cout_pad
    bytes_accessed = (n_pad * n_pad * 2                 # bf16 A_hat
                      + xw_bytes                        # bf16 XW (read once)
                      + n_pad * cout_pad * out_itemsize)  # H writeback

    return pl.pallas_call(
        kernel,
        out_shape=jax.ShapeDtypeStruct((n_pad, cout_pad), out_dtype),
        grid_spec=pltpu.PrefetchScalarGridSpec(
            num_scalar_prefetch=0,
            grid=(n_pad // tile_m, n_pad // tile_k),
            in_specs=[
                pl.BlockSpec((tile_m, tile_k), lambda i, k: (i, k)),
                xw_spec,
                pl.BlockSpec((1, cout_pad), lambda i, k: (0, 0)),
            ],
            out_specs=pl.BlockSpec((tile_m, cout_pad), lambda i, k: (i, 0)),
            scratch_shapes=[pltpu.VMEM((tile_m, cout_pad), jnp.float32)],
        ),
        compiler_params=pltpu.CompilerParams(
            dimension_semantics=("parallel", "arbitrary")),
        cost_estimate=pl.CostEstimate(
            flops=flops, transcendentals=0, bytes_accessed=bytes_accessed),
    )(a_bf16, xw_bf16, b_pad)


def gcn_layer(a_bf16, x_pad, w_pad, b_pad, tile_m, tile_k, apply_relu,
              out_dtype):
    xw = _feature_transform(x_pad, w_pad, tile_m)
    return _propagate(a_bf16, xw, b_pad, tile_m, tile_k, apply_relu, out_dtype)


# ------------------------------- JAX glue -----------------------------------

def build_normalized_adj(edge_index, num_nodes, edge_weight=None):
    """Dense A_hat = D^{-1/2} (A + I) D^{-1/2}, matching torch_geometric gcn_norm."""
    src = edge_index[0]
    dst = edge_index[1]
    num_edges = src.shape[0]
    if edge_weight is None:
        edge_weight = jnp.ones((num_edges,), dtype=jnp.float32)
    loop = jnp.arange(num_nodes, dtype=src.dtype)
    src = jnp.concatenate([src, loop])
    dst = jnp.concatenate([dst, loop])
    w = jnp.concatenate([edge_weight, jnp.ones((num_nodes,), jnp.float32)])
    a = jnp.zeros((num_nodes, num_nodes), jnp.float32).at[dst, src].add(w)
    deg = a.sum(axis=1)  # in-degree (incl. self loop), per gcn_norm
    dinv = jnp.where(deg > 0.0, 1.0 / jnp.sqrt(deg), 0.0)
    return dinv[:, None] * a * dinv[None, :]


def glorot(key, shape):
    fan_in, fan_out = shape
    limit = jnp.sqrt(6.0 / (fan_in + fan_out))
    return jax.random.uniform(key, shape, jnp.float32, -limit, limit)


def init_gcn_body_params(key, in_channels, hidden_channels, nlayer):
    params = []
    keys = jax.random.split(key, nlayer)
    params.append({
        "w": glorot(keys[0], (in_channels, hidden_channels)),
        "b": jnp.zeros((hidden_channels,), jnp.float32),
    })
    for i in range(nlayer - 1):
        params.append({
            "w": glorot(keys[i + 1], (hidden_channels, hidden_channels)),
            "b": jnp.zeros((hidden_channels,), jnp.float32),
        })
    return params


def gcn_body_forward(params, x, edge_index, edge_weight=None, dropout=0.5):
    """Mirrors GCN_body.forward (inference mode: dropout is identity)."""
    n, cin = x.shape
    hidden = params[0]["w"].shape[1]
    n_pad, tile_m, tile_k = _choose_tiles(n)
    # First-layer feature dim stays un-padded-to-128 (block last dim == full dim).
    cin_pad = _round_up(cin, SUBLANE)
    h_pad = _round_up(hidden, LANE)

    a_hat = build_normalized_adj(edge_index, n, edge_weight)
    # bf16 A_hat: the dominant N^2 HBM stream, reused by every layer.
    a_bf16 = jnp.zeros((n_pad, n_pad), jnp.bfloat16)
    a_bf16 = a_bf16.at[:n, :n].set(a_hat.astype(jnp.bfloat16))
    # TODO(synk): int8 (v5e/v6e) / fp8 (v7x) quantized A and block-sparse A
    # tiles (scalar-prefetch index_maps) for realistic graph sizes; the dense
    # N^2 adjacency is re-streamed from HBM once per layer.

    h = jnp.zeros((n_pad, cin_pad), jnp.bfloat16).at[:n, :cin].set(
        x.astype(jnp.bfloat16))
    num_layers = len(params)
    for idx, p in enumerate(params):
        w, b = p["w"], p["b"]
        ci, co = w.shape
        ci_pad = h.shape[1]
        w_pad = jnp.zeros((ci_pad, h_pad), jnp.bfloat16).at[:ci, :co].set(
            w.astype(jnp.bfloat16))
        b_pad = jnp.zeros((1, h_pad), jnp.float32).at[0, :co].set(b)
        last = idx == num_layers - 1
        # conv1 output is always ReLU'd; the last conv of the stack is not.
        apply_relu = (idx == 0) or (not last)
        out_dtype = jnp.float32 if last else jnp.bfloat16
        # TODO(synk): F.dropout(training=True) not implemented (eval -> identity).
        h = gcn_layer(a_bf16, h, w_pad, b_pad, tile_m, tile_k, apply_relu,
                      out_dtype)
    return h[:n, :hidden]


def gcn_body_reference(params, x, edge_index, edge_weight=None):
    """Pure-JAX f32 reference for correctness checking."""
    n = x.shape[0]
    a_hat = build_normalized_adj(edge_index, n, edge_weight)
    h = jnp.maximum(a_hat @ (x @ params[0]["w"]) + params[0]["b"], 0.0)
    num_layers = len(params)
    for i in range(1, num_layers):
        h = a_hat @ (h @ params[i]["w"]) + params[i]["b"]
        if i != num_layers - 1:
            h = jnp.maximum(h, 0.0)
    return h


# --------------------------------- main --------------------------------------

if __name__ == "__main__":
    key = jax.random.PRNGKey(0)
    k_x, k_e, k_p = jax.random.split(key, 3)

    num_nodes = 16
    in_channels = 8
    hidden_channels = 32
    nlayer = 2
    dropout = 0.5

    x = jax.random.normal(k_x, (num_nodes, in_channels), jnp.float32)
    num_edges = 48
    edge_index = jax.random.randint(k_e, (2, num_edges), 0, num_nodes,
                                    dtype=jnp.int32)

    params = init_gcn_body_params(k_p, in_channels, hidden_channels, nlayer)

    out = gcn_body_forward(params, x, edge_index, edge_weight=None,
                           dropout=dropout)
    out = jax.block_until_ready(out)

    assert out.shape == (num_nodes, hidden_channels), out.shape
    assert jnp.all(jnp.isfinite(out))

    ref = gcn_body_reference(params, x, edge_index)
    ref = jax.block_until_ready(ref)
    # bf16 A_hat / weights / intermediate activations -> loose tolerance vs f32.
    assert jnp.allclose(out, ref, rtol=5e-2, atol=5e-2), (
        float(jnp.max(jnp.abs(out - ref))))

    print("KERNEL_OK")
</pallas_src>

<mosaic_0001>
module attributes {stable_mosaic.version = 11 : i64} {
  func.func @_xw_kernel(%arg0: i32, %arg1: memref<64x8xbf16, #tpu.memory_space<vmem>>, %arg2: memref<8x128xbf16, #tpu.memory_space<vmem>>, %arg3: memref<64x128xbf16, #tpu.memory_space<vmem>>) attributes {dimension_semantics = [#tpu.dimension_semantics<parallel>], iteration_bounds = array<i64: 2>, scalar_prefetch = 0 : i64, scratch_operands = 0 : i64, tpu.core_type = #tpu.core_type<tc>, window_params = [{transform_indices = @transform_0, window_bounds = array<i64: 64, 8>}, {pipeline_mode = #tpu.pipeline_mode<synchronous>, transform_indices = @transform_1, window_bounds = array<i64: 8, 128>}, {transform_indices = @transform_2, window_bounds = array<i64: 64, 128>}]} {
    %c0 = arith.constant 0 : index
    %c0_0 = arith.constant 0 : index
    %0 = vector.load %arg1[%c0, %c0_0] : memref<64x8xbf16, #tpu.memory_space<vmem>>, vector<64x8xbf16>
    %c0_1 = arith.constant 0 : index
    %c0_2 = arith.constant 0 : index
    %1 = vector.load %arg2[%c0_1, %c0_2] : memref<8x128xbf16, #tpu.memory_space<vmem>>, vector<8x128xbf16>
    %cst = arith.constant dense<0.000000e+00> : vector<64x128xf32>
    %2 = tpu.matmul %0, %1, %cst {dimension_numbers = #tpu.dot_dimension_numbers<[1], [0], [0], [1], [0, 0, 1, 1], [], []>} : vector<64x8xbf16>, vector<8x128xbf16>, vector<64x128xf32> -> vector<64x128xf32>
    %3 = arith.truncf %2 : vector<64x128xf32> to vector<64x128xbf16>
    %c0_3 = arith.constant 0 : index
    %c0_4 = arith.constant 0 : index
    %4 = vector.load %arg3[%c0_3, %c0_4] : memref<64x128xbf16, #tpu.memory_space<vmem>>, vector<64x128xbf16>
    tpu.vector_store %arg3[%c0_3, %c0_4], %3 {strides = array<i32>} : memref<64x128xbf16, #tpu.memory_space<vmem>>, vector<64x128xbf16>,
    return
  }
  func.func @transform_0(%arg0: i32) -> (i32, i32) {
    %c0_i32 = arith.constant 0 : i32
    %c0_i32_0 = arith.constant 0 : i32
    return %arg0, %c0_i32 : i32, i32
  }
  func.func @transform_1(%arg0: i32) -> (i32, i32) {
    %c0_i32 = arith.constant 0 : i32
    %c0_i32_0 = arith.constant 0 : i32
    %c0_i32_1 = arith.constant 0 : i32
    return %c0_i32, %c0_i32_0 : i32, i32
  }
  func.func @transform_2(%arg0: i32) -> (i32, i32) {
    %c0_i32 = arith.constant 0 : i32
    %c0_i32_0 = arith.constant 0 : i32
    return %arg0, %c0_i32 : i32, i32
  }
}

</mosaic_0001>

<llo_original>
// kernel: tpu_custom_call.1
$region0: #{tpu_custom_call.1}
  #allocation0 [shape = 'u32[]', space=smem, size = 0x4, offset = 0x4, fixed_abs, tag = 'smem constant byte address 0x4 - core index']
  #allocation1 [shape = 'u32[72,128]{1,0:T(1,128)}', space=vmem, size = 0x9000, scoped, tag = 'internal scratch']
  %s0 = inlined_call_operand.vmem [shape: bf16[128,8], index: 0, kind: input, shape index: {}]
  %s1 = inlined_call_operand.vmem [shape: bf16[8,128], index: 1, kind: input, shape index: {}]
  %s2 = inlined_call_operand.hbm [shape: bf16[128,128], index: 2, kind: output, shape index: {}]
  %s3 = sld [smem:[#allocation0]]
  $region41: #{tpu_custom_call.1} parent=0
    _
  %s5 = ssub.s32 1, %s3
  %s6 = scalar_select 0, %s5, %s3
  $region1: #{tpu_custom_call.1} parent=0
    #allocation2 [shape = 'u8[32768]{0}', space=vmem, size = 0x8000, scoped, tag = 'output window, operand 0']
    #allocation3 [shape = 's32[2]{0}', space=sflag, size = 0x8, scoped, tag = 'scoped memory for tpu_custom_call.1']
    %7 = vsyncpa [#allocation3], 0
    %s8 = scalar_lea.sflag [#allocation3], 1
    %9 = vsyncpa %s8, 0
    loop: start=0, step=1, limit=4
    $region2: #{tpu_custom_call.1} parent=1 // loop_pre_header
      _
    $region3: #{tpu_custom_call.1} parent=1 // loop_header
      %s11 = sphi 0, %s15
      %p12 = scmp.ge.s32.totalorder %s11, 4
      %s21 = sphi 0, %s23
      %s24 = sphi 0, %s21
      %s25 = sphi 0, %s24
      %s41 = sphi 0, %s25
      %s45 = sphi 0, %s45
      %s47 = sphi 0, %s45
      %s48 = sphi 0, %s47
      %s62 = sphi 0, %s48
      %s68 = sphi 0, %s70
      %s71 = sphi 0, %s68
      %s72 = sphi 0, %s71
      %s88 = sphi 0, %s72
    $region4: #{tpu_custom_call.1} parent=1 // loop_header_branch
      %14 = sbr.rel (%p12) target = $region8
    $region5: #{tpu_custom_call.1} parent=1 // loop_body
      %s16 = ssub.s32 %s11, 1
      %s17 = ssub.s32 %s11, 2
      %s18 = sadd.s32 %s11, 1
      %s19 = ssub.s32 %s11, %s18
      %p20 = scmp.eq.s32.totalorder %s19, 0
      %s22 = sadd.s32 %s21, 1
      %s23 = scalar_select %p20, %s21, %s22
      %p26 = pneg %p20
      %p27 = scmp.eq.s32.totalorder %s11, 1
      %p28 = por %p26, %p27
      %p29 = scmp.ne.s32.totalorder %s21, %s24
      %p30 = scmp.eq.s32.totalorder %s11, 0
      %p31 = por %p29, %p30
      %p32 = scmp.ne.s32.totalorder %s21, %s24
      %p33 = scmp.eq.s32.totalorder %s16, 1
      %p34 = por %p32, %p33
      %p35 = scmp.ne.s32.totalorder %s24, %s25
      %p36 = scmp.eq.s32.totalorder %s16, 0
      %p37 = por %p35, %p36
      %p38 = scmp.ne.s32.totalorder %s24, %s25
      %p39 = scmp.eq.s32.totalorder %s17, 1
      %p40 = por %p38, %p39
      %p42 = scmp.ne.s32.totalorder %s25, %s41
      %p43 = scmp.eq.s32.totalorder %s17, 0
      %p44 = por %p42, %p43
      %s46 = sadd.s32 %s45, 1
      %p49 = scmp.eq.s32.totalorder %s11, 1
      %p50 = scmp.ne.s32.totalorder %s45, %s47
      %p51 = scmp.eq.s32.totalorder %s11, 0
      %p52 = por %p50, %p51
      %p53 = scmp.ne.s32.totalorder %s45, %s47
      %p54 = scmp.eq.s32.totalorder %s16, 1
      %p55 = por %p53, %p54
      %p56 = scmp.ne.s32.totalorder %s47, %s48
      %p57 = scmp.eq.s32.totalorder %s16, 0
      %p58 = por %p56, %p57
      %p59 = scmp.ne.s32.totalorder %s47, %s48
      %p60 = scmp.eq.s32.totalorder %s17, 1
      %p61 = por %p59, %p60
      %p63 = scmp.ne.s32.totalorder %s48, %s62
      %p64 = scmp.eq.s32.totalorder %s17, 0
      %p65 = por %p63, %p64
      %s66 = ssub.s32 %s11, %s18
      %p67 = scmp.eq.s32.totalorder %s66, 0
      %s69 = sadd.s32 %s68, 1
      %s70 = scalar_select %p67, %s68, %s69
      %p73 = pneg %p67
      %p74 = scmp.eq.s32.totalorder %s11, 1
      %p75 = por %p73, %p74
      %p76 = scmp.ne.s32.totalorder %s68, %s71
      %p77 = scmp.eq.s32.totalorder %s11, 0
      %p78 = por %p76, %p77
      %p79 = scmp.ne.s32.totalorder %s68, %s71
      %p80 = scmp.eq.s32.totalorder %s16, 1
      %p81 = por %p79, %p80
      %p82 = scmp.ne.s32.totalorder %s71, %s72
      %p83 = scmp.eq.s32.totalorder %s16, 0
      %p84 = por %p82, %p83
      %p85 = scmp.ne.s32.totalorder %s71, %s72
      %p86 = scmp.eq.s32.totalorder %s17, 1
      %p87 = por %p85, %p86
      %p89 = scmp.ne.s32.totalorder %s72, %s88
      %p90 = scmp.eq.s32.totalorder %s17, 0
      %p91 = por %p89, %p90
      %p92 = scmp.le.s32.totalorder 1, %s11
      %p93 = scmp.lt.s32.totalorder %s11, 3
      %p94 = pnand %p92, %p93
      %p95 = pneg %p94
      // Predicated region
      $region9: #{tpu_custom_call.1} parent=5 // pred_check
        _
      $region10: #{tpu_custom_call.1} parent=5 // pred_check_branch
        %97 = sbr.rel (%p94) target = $region12
      $region11: #{tpu_custom_call.1} parent=5 // pred_region
        %s98 = ssub.s32 %s11, 1
        // Predicated region
        $region13: #{tpu_custom_call.1} parent=11 // pred_check
          %p99 = pneg %p58
        $region14: #{tpu_custom_call.1} parent=11 // pred_check_branch
          %101 = sbr.rel (%p99) target = $region16
        $region15: #{tpu_custom_call.1} parent=11 // pred_region
          _
        $region16: #{tpu_custom_call.1} parent=11 // pred_fallthru
          _
      $region12: #{tpu_custom_call.1} parent=5 // pred_fallthru
        _
      %p102 = scmp.lt.s32.totalorder %s11, 2
      // Predicated region
      $region17: #{tpu_custom_call.1} parent=5 // pred_check
        %p103 = pneg %p102
      $region18: #{tpu_custom_call.1} parent=5 // pred_check_branch
        %105 = sbr.rel (%p103) target = $region20
      $region19: #{tpu_custom_call.1} parent=5 // pred_region
        // Predicated region
        $region21: #{tpu_custom_call.1} parent=19 // pred_check
          %p106 = pneg %p31
        $region22: #{tpu_custom_call.1} parent=19 // pred_check_branch
          %108 = sbr.rel (%p106) target = $region24
        $region23: #{tpu_custom_call.1} parent=19 // pred_region
          %s109 = smul.u32 8, %s11
          %p110 = scmp.lt.s32.totalorder %s109, 15
          %s111 = scalar_select %p110, %s109, 15
          %s112 = smul.addr %s111, 4
          %s113 = scalar_lea.vmem %s0, %s112
          %s114 = smul.u32 8, %s11
        $region24: #{tpu_custom_call.1} parent=19 // pred_fallthru
          _
      $region20: #{tpu_custom_call.1} parent=5 // pred_fallthru
        _
      %p115 = scmp.le.s32.totalorder 1, %s11
      %p116 = scmp.lt.s32.totalorder %s11, 3
      %p117 = pnand %p115, %p116
      %p118 = pneg %p117
      // Predicated region
      $region25: #{tpu_custom_call.1} parent=5 // pred_check
        _
      $region26: #{tpu_custom_call.1} parent=5 // pred_check_branch
        %120 = sbr.rel (%p117) target = $region28
      $region27: #{tpu_custom_call.1} parent=5 // pred_region
        %s121 = ssub.s32 %s11, 1
        %s122 = smul.u32 8, %s16
        %p123 = scmp.lt.s32.totalorder %s122, 15
        %s124 = scalar_select %p123, %s122, 15
        %s125 = smul.addr %s124, 4
        %s126 = scalar_lea.vmem %s0, %s125
        %p127 = pneg %p37
        %p128 = pneg %p34
        %p129 = pneg %p58
        %p130 = pneg %p55
        %p131 = pneg %p84
        %p132 = pneg %p81
        %s133 = sand.u32 %s71, 1
        %s134 = scalar_lea.sflag [#allocation3], %s133
        %s135 = sand.u32 %s71, 1
        %s136 = smul.addr %s135, 32
        %s137 = scalar_lea.vmem [#allocation2], %s136
        %s138 = smul.u32 8, %s16
        %p139 = scmp.lt.s32.totalorder %s138, 15
        %s140 = scalar_select %p139, %s138, 15
        %s141 = smul.addr %s140, 4
        %s142 = scalar_lea.vmem %s0, %s141
        %s143 = smul.u32 8, %s16
        %s144 = smul.u32 8, %s16
        %v146 = vld [vmem:[%s142] sm:$0xf]
        %v147 = vld [vmem:[%s142 + $0x4] sm:$0xf]
        %v148 = vld [vmem:[%s142 + $0x8] sm:$0xf]
        %v149 = vld [vmem:[%s142 + $0xc] sm:$0xf]
        %v150 = vld [vmem:[%s142 + $0x10] sm:$0xf]
        %v151 = vld [vmem:[%s142 + $0x14] sm:$0xf]
        %v152 = vld [vmem:[%s142 + $0x18] sm:$0xf]
        %v153 = vld [vmem:[%s142 + $0x1c] sm:$0xf]
        %v154 = vld [vmem:[%s1] sm:$0xf]
        %v163 = vunpack.c.l.b16 %v146
        %v164 = vunpack.c.l.b16 %v147
        %v165 = vunpack.c.l.b16 %v148
        %v166 = vunpack.c.l.b16 %v149
        %v167 = vunpack.c.l.b16 %v150
        %v168 = vunpack.c.l.b16 %v151
        %v169 = vunpack.c.l.b16 %v152
        %v170 = vunpack.c.l.b16 %v153
        %v171 = vpack.c.b16 %v164, %v163
        %v172 = vpack.c.b16 %v166, %v165
        %v173 = vpack.c.b16 %v168, %v167
        %v174 = vpack.c.b16 %v170, %v169
        %vm175 = vcmask 64512
        %v177 = vsel %vm175, %v171, 0
        %v180 = vsel %vm175, %v172, 0
        %v183 = vsel %vm175, %v173, 0
        %v186 = vsel %vm175, %v174, 0
        %vm188 = vcmask 1043456
        %v190 = vsel %vm188, %v154, 0
        %192 = vmatpush.bf16.msra.mxu0 0
        %193 = vmatpush.bf16.msra.mxu0 0
        %194 = vmatpush.bf16.msra.mxu0 0
        %195 = vmatpush.bf16.msra.mxu0 0
        %196 = vmatpush.bf16.msra.mxu0 0
        %197 = vmatpush.bf16.msra.mxu0 0
        %198 = vmatpush.bf16.msra.mxu0 0
        %199 = vmatpush.bf16.msra.mxu0 %v190
        %200 = vmatmul.bf16.gmra.mxu0 %v177
        %v201 = vpop.f32.mrf.mxu0
        %v202 = vadd.f32 0.0, %v201
        %v203 = vpop.f32.mrf.mxu0
        %v204 = vadd.f32 0.0, %v203
        %205 = vmatmul.bf16.gmra.mxu0 %v180
        %v206 = vpop.f32.mrf.mxu0
        %v207 = vadd.f32 0.0, %v206
        %v208 = vpop.f32.mrf.mxu0
        %v209 = vadd.f32 0.0, %v208
        %210 = vmatmul.bf16.gmra.mxu0 %v183
        %v211 = vpop.f32.mrf.mxu0
        %v212 = vadd.f32 0.0, %v211
        %v213 = vpop.f32.mrf.mxu0
        %v214 = vadd.f32 0.0, %v213
        %215 = vmatmul.bf16.gmra.mxu0 %v186
        %v216 = vpop.f32.mrf.mxu0
        %v217 = vadd.f32 0.0, %v216
        %v218 = vpop.f32.mrf.mxu0
        %v219 = vadd.f32 0.0, %v218
        %220 = vdwg.mxu0
        %v221 = vpack.c.bf16 %v202, %v202
        %v222 = vpack.c.bf16 %v204, %v204
        %v223 = vpack.c.bf16 %v207, %v207
        %v224 = vpack.c.bf16 %v209, %v209
        %v225 = vpack.c.bf16 %v212, %v212
        %v226 = vpack.c.bf16 %v214, %v214
        %v227 = vpack.c.bf16 %v217, %v217
        %v228 = vpack.c.bf16 %v219, %v219
        %229 = vst [vmem:[%s137] sm:$0xf] %v221
        %230 = vst [vmem:[%s137 + $0x4] sm:$0xf] %v222
        %231 = vst [vmem:[%s137 + $0x8] sm:$0xf] %v223
        %232 = vst [vmem:[%s137 + $0xc] sm:$0xf] %v224
        %233 = vst [vmem:[%s137 + $0x10] sm:$0xf] %v225
        %234 = vst [vmem:[%s137 + $0x14] sm:$0xf] %v226
        %235 = vst [vmem:[%s137 + $0x18] sm:$0xf] %v227
        %236 = vst [vmem:[%s137 + $0x1c] sm:$0xf] %v228
        %s237 = sand.u32 %s71, 1
        %s238 = scalar_lea.sflag [#allocation3], %s237
        %s239 = sand.u32 %s71, 1
        %s240 = smul.addr %s239, 32
        %s241 = scalar_lea.vmem [#allocation2], %s240
        // Predicated region
        $region29: #{tpu_custom_call.1} parent=27 // pred_check
          %p242 = pneg %p81
        $region30: #{tpu_custom_call.1} parent=27 // pred_check_branch
          %244 = sbr.rel (%p242) target = $region32
        $region31: #{tpu_custom_call.1} parent=27 // pred_region
          %s245 = smul.u32 8, %s16
          %247 = vsyncadd %s238, 0
          %s248 = smul.addr %s245, 4
          %s249 = scalar_lea.hbm %s2, %s248
          %s250 = sshll.u32 %s241, 4
          %s251 = int_to_ptr.vmem [resolvable:$true] %s250
          %s252 = sshll.u32 %s249, 4
          %s253 = int_to_ptr.hbm [resolvable:$true] %s252
          %258 = dma.vmem_to_hbm [thread:$0]  %s251, 512, %s253, %s238, 64, 64, 4
        $region32: #{tpu_custom_call.1} parent=27 // pred_fallthru
          _
      $region28: #{tpu_custom_call.1} parent=5 // pred_fallthru
        _
      %p259 = scmp.le.s32.totalorder 2, %s11
      // Predicated region
      $region33: #{tpu_custom_call.1} parent=5 // pred_check
        %p260 = pneg %p259
      $region34: #{tpu_custom_call.1} parent=5 // pred_check_branch
        %262 = sbr.rel (%p260) target = $region36
      $region35: #{tpu_custom_call.1} parent=5 // pred_region
        %s263 = ssub.s32 %s11, 2
        // Predicated region
        $region37: #{tpu_custom_call.1} parent=35 // pred_check
          %p264 = pneg %p87
        $region38: #{tpu_custom_call.1} parent=35 // pred_check_branch
          %266 = sbr.rel (%p264) target = $region40
        $region39: #{tpu_custom_call.1} parent=35 // pred_region
          %s267 = sand.u32 %s72, 1
          %s268 = scalar_lea.sflag [#allocation3], %s267
          %s269 = sand.u32 %s72, 1
          %s270 = smul.addr %s269, 32
          %s271 = scalar_lea.vmem [#allocation2], %s270
          %273 = dma.done %s268, 512
        $region40: #{tpu_custom_call.1} parent=35 // pred_fallthru
          _
      $region36: #{tpu_custom_call.1} parent=5 // pred_fallthru
        _
    $region6: #{tpu_custom_call.1} parent=1 // loop_footer
      %s15 = sadd.s32 1, %s11
    $region7: #{tpu_custom_call.1} parent=1 // loop_footer_branch
      %10 = sbr.rel target = $region3
    $region8: #{tpu_custom_call.1} parent=1 // loop_exit
      _
    %274 = vsyncpa [#allocation3], 1
    %s275 = scalar_lea.sflag [#allocation3], 1
    %276 = vsyncpa %s275, 1

</llo_original>
